<compile_context>
chip_gen: v7x
topology: tpu7x:2x2x1
jax: 0.10.0
libtpu: 0.0.40
codegen_flags: <defaults>
</compile_context>

<pallas_src>
import math

import jax
import jax.numpy as jnp
from jax.experimental import pallas as pl
from jax.experimental.pallas import tpu as pltpu

_VMEM_LIMIT_BYTES = 48 * 1024 * 1024    # scoped VMEM request; fits under v7x's 64 MiB/TC physical
_VMEM_BUDGET_BYTES = 36 * 1024 * 1024   # what the block-size chooser targets (headroom under the limit)
_TARGET_X_BLOCK_BYTES = 4 * 1024 * 1024  # ~4 MiB of x per step: amortizes ~0.35 µs/step on v6e/v7x


def build_pe_table(d_model: int, max_len: int, dtype=jnp.float32) -> jnp.ndarray:
    """Deterministic buffer construction; mirrors the PyTorch __init__ exactly.

    Pass `dtype` matching the activations so the cast happens once at init,
    not on every forward call.
    """
    position = jnp.arange(0, max_len, dtype=jnp.float32)[:, None]            # (max_len, 1)
    div_term = jnp.exp(
        jnp.arange(0, d_model, 2, dtype=jnp.float32) * (-math.log(10000.0) / d_model)
    )
    n_dims = (d_model // 2) * 2
    pe = jnp.zeros((max_len, d_model), dtype=jnp.float32)
    pe_even = jnp.sin(position * div_term[: n_dims // 2])
    pe_odd = jnp.cos(position * div_term[: n_dims // 2])
    pe = pe.at[:, 0:n_dims:2].set(pe_even)
    pe = pe.at[:, 1:n_dims:2].set(pe_odd)
    if d_model % 2 == 1:
        last_dim = jnp.sin(position * div_term[-1])
        pe = pe.at[:, -1].set(jnp.squeeze(last_dim, -1))
    return pe[None, :, :].astype(dtype)                                      # (1, max_len, d_model)


def _add_pe_kernel(x_ref, pe_ref, o_ref):
    # x block: (B, ...) ; pe block: (1, ...) — broadcast over batch inside VMEM.
    o_ref[...] = (x_ref[...] + pe_ref[...]).astype(o_ref.dtype)


def _sublane_granularity(itemsize: int) -> int:
    # f32: 8 sublanes/vreg; bf16 packs 2/sublane -> 16 rows; int8/fp8 -> 32 rows.
    return max(8, 32 // itemsize)


def _round_down(v: int, m: int) -> int:
    return (v // m) * m


def _choose_seq_tile(B: int, S: int, D: int, itemsize: int) -> int:
    """Sequence tile for the (B, ts, D) path, with padding-aware VMEM accounting."""
    g = _sublane_granularity(itemsize)
    lane_d = pl.cdiv(D, 128) * 128                       # lane-padded width in VMEM
    row_bytes = lane_d * itemsize
    # Double-buffered padded VMEM per step: 2 * (x + out + pe) blocks.
    per_ts_bytes = 2 * (2 * B + 1) * row_bytes
    ts_vmem = max(1, _VMEM_BUDGET_BYTES // per_ts_bytes)
    ts_target = max(1, _TARGET_X_BLOCK_BYTES // (B * row_bytes))
    ts = min(S, ts_vmem, ts_target)
    if ts < S:
        ts = max(g, _round_down(ts, g))                  # keep tiles sublane-dense
        ts = min(ts, S)                                  # (ts == S is allowed by the (8,128) rule)
    return ts


def _choose_flat_chunk(B: int, n: int, itemsize: int) -> int:
    """Lane chunk for the flattened (B, n) path, accounting for sublane padding of small B."""
    g = _sublane_granularity(itemsize)
    bp = pl.cdiv(B, g) * g                               # (B, chunk) x/out blocks pad B -> bp sublanes
    # Double-buffered padded VMEM per step: 2 * (bp [x] + bp [out] + g [pe]) * chunk * itemsize.
    per_col_bytes = 2 * (2 * bp + g) * itemsize
    c_vmem = max(128, _VMEM_BUDGET_BYTES // per_col_bytes)
    c_target = max(128, _TARGET_X_BLOCK_BYTES // (bp * itemsize))
    chunk = min(n, c_vmem, c_target)
    chunk = max(128, _round_down(chunk, 128))
    return min(chunk, n)                                 # n is a multiple of 128 on this path


def positional_encoding_forward(x: jnp.ndarray, pe: jnp.ndarray) -> jnp.ndarray:
    """x: (B, S, D); pe: (1, max_len, D). Returns x + pe[:, :S] broadcast over batch."""
    B, S, D = x.shape
    assert pe.ndim == 3 and pe.shape[0] == 1 and pe.shape[2] == D
    assert S <= pe.shape[1]

    if pe.dtype != x.dtype:
        # Prefer pre-casting the table once at init (build_pe_table(..., dtype=x.dtype));
        # fallback: cast only the prefix actually used this call.
        pe = pe[:, :S, :].astype(x.dtype)
    max_len = pe.shape[1]
    itemsize = jnp.dtype(x.dtype).itemsize

    compiler_params = pltpu.CompilerParams(
        # Single independent axis; "parallel" lets Mosaic shard steps across v7x's
        # 2 TensorCores.  If profiling shows it stays on one TC, switch this axis
        # to pltpu.CORE_PARALLEL.
        dimension_semantics=("parallel",),
        vmem_limit_bytes=_VMEM_LIMIT_BYTES,
    )

    if D % 128 == 0 or (S * D) % 128 != 0:
        # Primary path: tile the sequence dim, keep full D last.  Blocks are
        # sublane-dense and (when D % 128 == 0) lane-dense; the pe (1, ts, D)
        # block is not batch-padded.  pe is passed whole — the BlockSpec only
        # ever addresses rows < S, so no prefix-slice copy is needed.
        ts = _choose_seq_tile(B, S, D, itemsize)
        return pl.pallas_call(
            _add_pe_kernel,
            out_shape=jax.ShapeDtypeStruct((B, S, D), x.dtype),
            grid_spec=pltpu.PrefetchScalarGridSpec(
                num_scalar_prefetch=0,
                grid=(pl.cdiv(S, ts),),
                in_specs=[
                    pl.BlockSpec((B, ts, D), lambda s: (0, s, 0)),   # x: full batch, one seq tile
                    pl.BlockSpec((1, ts, D), lambda s: (0, s, 0)),   # pe: same tile, broadcast over B
                ],
                out_specs=pl.BlockSpec((B, ts, D), lambda s: (0, s, 0)),
            ),
            compiler_params=compiler_params,
        )(x, pe)

    # Lane-unfriendly D (< 128 or not a multiple of 128) but S*D lane-aligned:
    # flatten (S, D) so every load/store uses full 128-lane vregs.  Each pe
    # chunk is DMA'd from HBM exactly once and reused for all B rows — total
    # HBM traffic is (2B + 1) * S * D * itemsize, the minimum for a "read pe" add.
    n = S * D
    chunk = _choose_flat_chunk(B, n, itemsize)
    x_flat = x.reshape(B, n)
    pe_flat = pe.reshape(1, max_len * D)      # free reshape of a contiguous buffer; no prefix copy
    out_flat = pl.pallas_call(
        _add_pe_kernel,
        out_shape=jax.ShapeDtypeStruct((B, n), x.dtype),
        grid_spec=pltpu.PrefetchScalarGridSpec(
            num_scalar_prefetch=0,
            grid=(pl.cdiv(n, chunk),),
            in_specs=[
                pl.BlockSpec((B, chunk), lambda c: (0, c)),          # x: all batch rows, one chunk
                pl.BlockSpec((1, chunk), lambda c: (0, c)),          # pe: same chunk, broadcast over B
            ],
            out_specs=pl.BlockSpec((B, chunk), lambda c: (0, c)),
        ),
        compiler_params=compiler_params,
    )(x_flat, pe_flat)
    return out_flat.reshape(B, S, D)


if __name__ == "__main__":
    key = jax.random.PRNGKey(0)

    # Case 1 (module-sized small shapes, exercises the flat 128-lane path: D = 32).
    B, S, D = 2, 8, 32
    MAX_LEN = 64
    x = jax.random.normal(key, (B, S, D), dtype=jnp.float32)
    pe = build_pe_table(D, MAX_LEN, dtype=x.dtype)        # pre-cast once at init
    out = jax.block_until_ready(positional_encoding_forward(x, pe))
    ref = x + pe[:, :S]
    assert out.shape == (B, S, D)
    assert jnp.allclose(out, ref, atol=1e-6, rtol=1e-6)

    # Case 2 (exercises the primary lane-dense (B, ts, D) path: D = 128).
    B2, S2, D2 = 2, 16, 128
    MAX_LEN2 = 32
    x2 = jax.random.normal(jax.random.PRNGKey(0), (B2, S2, D2), dtype=jnp.float32)
    pe2 = build_pe_table(D2, MAX_LEN2, dtype=x2.dtype)
    out2 = jax.block_until_ready(positional_encoding_forward(x2, pe2))
    ref2 = x2 + pe2[:, :S2]
    assert out2.shape == (B2, S2, D2)
    assert jnp.allclose(out2, ref2, atol=1e-6, rtol=1e-6)

    print("KERNEL_OK")
</pallas_src>

<mosaic_0001>
module attributes {stable_mosaic.version = 11 : i64} {
  func.func @_add_pe_kernel(%arg0: i32, %arg1: memref<2x256xf32, #tpu.memory_space<vmem>>, %arg2: memref<1x256xf32, #tpu.memory_space<vmem>>, %arg3: memref<2x256xf32, #tpu.memory_space<vmem>>) attributes {dimension_semantics = [#tpu.dimension_semantics<parallel>], iteration_bounds = array<i64: 1>, scalar_prefetch = 0 : i64, scratch_operands = 0 : i64, tpu.core_type = #tpu.core_type<tc>, window_params = [{transform_indices = @transform_0, window_bounds = array<i64: 2, 256>}, {transform_indices = @transform_1, window_bounds = array<i64: 1, 256>}, {transform_indices = @transform_2, window_bounds = array<i64: 2, 256>}]} {
    %c0 = arith.constant 0 : index
    %c0_0 = arith.constant 0 : index
    %0 = vector.load %arg1[%c0, %c0_0] : memref<2x256xf32, #tpu.memory_space<vmem>>, vector<2x256xf32>
    %c0_1 = arith.constant 0 : index
    %c0_2 = arith.constant 0 : index
    %1 = vector.load %arg2[%c0_1, %c0_2] : memref<1x256xf32, #tpu.memory_space<vmem>>, vector<1x256xf32>
    %2 = vector.broadcast %1 : vector<1x256xf32> to vector<2x256xf32>
    %3 = arith.addf %0, %2 : vector<2x256xf32>
    %c0_3 = arith.constant 0 : index
    %c0_4 = arith.constant 0 : index
    %4 = vector.load %arg3[%c0_3, %c0_4] : memref<2x256xf32, #tpu.memory_space<vmem>>, vector<2x256xf32>
    tpu.vector_store %arg3[%c0_3, %c0_4], %3 {strides = array<i32>} : memref<2x256xf32, #tpu.memory_space<vmem>>, vector<2x256xf32>,
    return
  }
  func.func @transform_0(%arg0: i32) -> (i32, i32) {
    %c0_i32 = arith.constant 0 : i32
    %c0_i32_0 = arith.constant 0 : i32
    return %c0_i32, %arg0 : i32, i32
  }
  func.func @transform_1(%arg0: i32) -> (i32, i32) {
    %c0_i32 = arith.constant 0 : i32
    %c0_i32_0 = arith.constant 0 : i32
    return %c0_i32, %arg0 : i32, i32
  }
  func.func @transform_2(%arg0: i32) -> (i32, i32) {
    %c0_i32 = arith.constant 0 : i32
    %c0_i32_0 = arith.constant 0 : i32
    return %c0_i32, %arg0 : i32, i32
  }
}

</mosaic_0001>

<llo_original>
// kernel: tpu_custom_call.1
$region0: #{tpu_custom_call.1}
  #allocation0 [shape = 'u32[]', space=smem, size = 0x4, offset = 0x4, fixed_abs, tag = 'smem constant byte address 0x4 - core index']
  #allocation1 [shape = 'u32[144,128]{1,0:T(1,128)}', space=vmem, size = 0x12000, scoped, tag = 'internal scratch']
  %s0 = inlined_call_operand.hbm [shape: f32[2,256], index: 0, kind: input, shape index: {}]
  %s1 = inlined_call_operand.hbm [shape: f32[1,2048], index: 1, kind: input, shape index: {}]
  %s2 = inlined_call_operand.hbm [shape: f32[2,256], index: 2, kind: output, shape index: {}]
  %s3 = sld [smem:[#allocation0]]
  $region26: #{tpu_custom_call.1} parent=0
    _
  %s5 = ssub.s32 1, %s3
  %s6 = scalar_select 0, %s5, %s3
  $region1: #{tpu_custom_call.1} parent=0
    #allocation2 [shape = 'u8[2048]{0}', space=vmem, size = 0x800, scoped, tag = 'input window, operand 0, single buffered']
    #allocation3 [shape = 's32[1]{0}', space=sflag, size = 0x4, scoped, tag = 'scoped memory for tpu_custom_call.1']
    #allocation4 [shape = 's32[1]{0}', space=sflag, size = 0x4, scoped, tag = 'scoped memory for tpu_custom_call.1']
    #allocation5 [shape = 'u8[1024]{0}', space=vmem, size = 0x400, scoped, tag = 'input window, operand 1, single buffered']
    #allocation6 [shape = 's32[1]{0}', space=sflag, size = 0x4, scoped, tag = 'scoped memory for tpu_custom_call.1']
    #allocation7 [shape = 'u8[2048]{0}', space=vmem, size = 0x800, scoped, tag = 'output window, operand 0, single buffered']
    %7 = vsyncpa [#allocation3], 0
    %8 = vsyncpa [#allocation6], 0
    %9 = vsyncpa [#allocation4], 0
    // Predicated region
    $region2: #{tpu_custom_call.1} parent=1 // pred_check
      _
    $region3: #{tpu_custom_call.1} parent=1 // pred_check_branch
      %11 = sbr.rel (0) target = $region5
    $region4: #{tpu_custom_call.1} parent=1 // pred_region
      %s13 = ssub.s32 64, 64
      %14 = vsyncadd [#allocation3], %s13
      %s16 = sshll.u32 [#allocation2], 4
      %s17 = int_to_ptr.vmem [resolvable:$true] %s16
      %19 = dma.hbm_to_vmem [thread:$0]  %s0, 64, %s17, [#allocation3]
    $region5: #{tpu_custom_call.1} parent=1 // pred_fallthru
      _
    // Predicated region
    $region6: #{tpu_custom_call.1} parent=1 // pred_check
      _
    $region7: #{tpu_custom_call.1} parent=1 // pred_check_branch
      %21 = sbr.rel (0) target = $region9
    $region8: #{tpu_custom_call.1} parent=1 // pred_region
      %s23 = ssub.s32 32, 32
      %24 = vsyncadd [#allocation6], %s23
      %s26 = sshll.u32 [#allocation5], 4
      %s27 = int_to_ptr.vmem [resolvable:$true] %s26
      %29 = dma.hbm_to_vmem [thread:$0]  %s1, 32, %s27, [#allocation6]
    $region9: #{tpu_custom_call.1} parent=1 // pred_fallthru
      _
    // Predicated region
    $region10: #{tpu_custom_call.1} parent=1 // pred_check
      _
    $region11: #{tpu_custom_call.1} parent=1 // pred_check_branch
      %31 = sbr.rel (0) target = $region13
    $region12: #{tpu_custom_call.1} parent=1 // pred_region
      %32 = dma.done [#allocation3], 64
    $region13: #{tpu_custom_call.1} parent=1 // pred_fallthru
      _
    // Predicated region
    $region14: #{tpu_custom_call.1} parent=1 // pred_check
      _
    $region15: #{tpu_custom_call.1} parent=1 // pred_check_branch
      %34 = sbr.rel (0) target = $region17
    $region16: #{tpu_custom_call.1} parent=1 // pred_region
      %35 = dma.done [#allocation6], 32
    $region17: #{tpu_custom_call.1} parent=1 // pred_fallthru
      _
    %v36 = vld [vmem:[#allocation2] sm:$0xf]
    %v37 = vld [vmem:[#allocation5] sm:$0x3]
    %v39 = vlaneseq
    %v40 = vshrl.u32 %v39, 7
    %v41 = vsub.s32 0, %v40
    %v42 = vrot.slane %v37, %v41
    %v43 = vlaneseq
    %v44 = vshrl.u32 %v43, 7
    %v45 = vsub.s32 1, %v44
    %v46 = vrot.slane %v37, %v45
    %v47 = vcombine.low %v42, %v46
    %v49 = vunpack.c.l.s4 1983009808
    %v50 = vunpack.c.0.s8 %v49
    %v51 = vlaneseq
    %v52 = vshrl.u32 %v51, 7
    %v53 = vsub.s32 %v50, %v52
    %v54 = vrot.slane %v47, %v53
    %v56 = vadd.f32 %v36, %v54
    %57 = vst [vmem:[#allocation7] sm:$0xf] %v56
    // Predicated region
    $region18: #{tpu_custom_call.1} parent=1 // pred_check
      _
    $region19: #{tpu_custom_call.1} parent=1 // pred_check_branch
      %59 = sbr.rel (0) target = $region21
    $region20: #{tpu_custom_call.1} parent=1 // pred_region
      %s61 = ssub.s32 64, 64
      %62 = vsyncadd [#allocation4], %s61
      %s64 = sshll.u32 [#allocation7], 4
      %s65 = int_to_ptr.vmem [resolvable:$true] %s64
      %67 = dma.vmem_to_hbm [thread:$0]  %s65, 64, %s2, [#allocation4]
    $region21: #{tpu_custom_call.1} parent=1 // pred_fallthru
      _
    // Predicated region
    $region22: #{tpu_custom_call.1} parent=1 // pred_check
      _
    $region23: #{tpu_custom_call.1} parent=1 // pred_check_branch
      %69 = sbr.rel (0) target = $region25
    $region24: #{tpu_custom_call.1} parent=1 // pred_region
      %70 = dma.done [#allocation4], 64
    $region25: #{tpu_custom_call.1} parent=1 // pred_fallthru
      _
    %71 = vsyncpa [#allocation3], 1
    %72 = vsyncpa [#allocation6], 1
    %73 = vsyncpa [#allocation4], 1

</llo_original>
